<compile_context>
chip_gen: v5e
topology: v5e:2x2
jax: 0.10.0
libtpu: 0.0.40
codegen_flags: <defaults>
</compile_context>

<pallas_src>
import functools

import jax
import jax.numpy as jnp
from jax.experimental import pallas as pl
from jax.experimental.pallas import tpu as pltpu

_LANE = 128
_MAX_TILE_ROWS = 2048      # (2048,128) f32 slab = 1 MiB; ~6 MiB double-buffered total
_W_CLASS0 = 0.01
_W_CLASS1 = 1.0


def _weighted_ce2_kernel(x_ref, t_ref, out_ref, *, total_rows, tile_rows,
                         tiles_per_shard, needs_mask):
    """Partial sums of class-weighted 2-class cross-entropy.

    x_ref  : (2, tile_rows, 128) logits, native dtype (upcast to f32 here)
    t_ref  : (tile_rows, 128)    integer labels
    out_ref: (2, 8, 128) f32     [0] = sum(w_y * nll), [1] = sum(w_y)
                                 accumulated across the row-tile grid axis
    """
    r = pl.program_id(2)

    @pl.when(r == 0)
    def _init():
        out_ref[...] = jnp.zeros_like(out_ref)

    x0 = x_ref[0].astype(jnp.float32)          # (TR, 128) class-0 logits
    x1 = x_ref[1].astype(jnp.float32)          # (TR, 128) class-1 logits
    t = t_ref[...]                             # (TR, 128) labels

    # 2-class log-sum-exp: max(x0,x1) + log(1 + exp(-|x0-x1|)).
    # (log1p would be marginally more accurate; kept as log(1+exp) for guaranteed
    #  Mosaic lowering — the difference is <1e-7 and invisible at the loss level.)
    ad = jnp.abs(x0 - x1)
    lse = jnp.maximum(x0, x1) + jnp.log(1.0 + jnp.exp(-ad))

    # target logit / per-pixel class weight via selects (C == 2)
    x_y = jnp.where(t == 1, x1, x0)
    w_y = jnp.where(t == 1, _W_CLASS1,
                    jnp.where(t == 0, _W_CLASS0, 0.0)).astype(jnp.float32)
    per_pixel = w_y * (lse - x_y)

    if needs_mask:
        # Ragged tail / overflow shard: out-of-range rows contain garbage bytes
        # (possibly NaN/Inf once decoded), so zero them with a select, not w*0.
        s = pl.program_id(0)
        row = jax.lax.broadcasted_iota(jnp.int32, (tile_rows, _LANE), 0)
        global_row = (s * tiles_per_shard + r) * tile_rows + row
        valid = global_row < total_rows
        per_pixel = jnp.where(valid, per_pixel, 0.0)
        w_y = jnp.where(valid, w_y, 0.0)

    if tile_rows % 8 == 0:
        # vreg-wise (8,128) partial sums: no per-step cross-sublane reduce
        num_part = per_pixel.reshape(tile_rows // 8, 8, _LANE).sum(axis=0)
        den_part = w_y.reshape(tile_rows // 8, 8, _LANE).sum(axis=0)
        out_ref[0, :, :] += num_part
        out_ref[1, :, :] += den_part
    else:
        # tiny images only (tile_rows == R < 8 or not a multiple of 8)
        out_ref[0, 0:1, :] += jnp.sum(per_pixel, axis=0, keepdims=True)
        out_ref[1, 0:1, :] += jnp.sum(w_y, axis=0, keepdims=True)


def tversky_loss(pred, target):
    """pred: (N, 2, H, W) (or (N, 1, 2, H, W)) float logits; target: (N, H, W) ints."""
    pred = jnp.asarray(pred)
    if pred.ndim >= 2 and pred.shape[1] == 1:          # torch .squeeze(dim=1)
        pred = jnp.squeeze(pred, axis=1)
    if pred.ndim != 4 or pred.shape[1] != 2:
        raise ValueError(f"expected (N, 2, H, W) logits after squeeze, got {pred.shape}")
    if pred.dtype not in (jnp.float32, jnp.bfloat16):
        pred = pred.astype(jnp.float32)                # stream bf16 / f32 natively

    target = jnp.asarray(target)
    if (not jnp.issubdtype(target.dtype, jnp.integer)) or target.dtype.itemsize > 4:
        target = target.astype(jnp.int32)              # matches torch .long(); int8/16/32 pass through

    N, C, H, W = pred.shape
    HW = H * W
    pred = pred.reshape(N, C, HW)                      # free contiguous reshape
    target = target.reshape(N, HW)

    pad = (-HW) % _LANE
    if pad:
        # TODO(synk): replace this (rare, H*W % 128 != 0) pad with in-kernel
        # flat-pixel masking to avoid the extra HBM pass.
        pred = jnp.pad(pred, ((0, 0), (0, 0), (0, pad)))
        target = jnp.pad(target, ((0, 0), (0, pad)), constant_values=2)  # label 2 -> weight 0
    R = (HW + pad) // _LANE

    TR = R if R <= _MAX_TILE_ROWS else _MAX_TILE_ROWS
    tiles_total = pl.cdiv(R, TR)
    shards = 2 if tiles_total >= 2 else 1              # megacore split of the row tiles
    tiles_per_shard = pl.cdiv(tiles_total, shards)
    needs_mask = (shards * tiles_per_shard * TR) > R
    needs_clamp = (shards * tiles_per_shard) > tiles_total

    pred = pred.reshape(N, C, R, _LANE)                # free reshape, lane-dense
    target = target.reshape(N, R, _LANE)

    if needs_clamp:
        def _tile(s, r):
            return jnp.minimum(s * tiles_per_shard + r, tiles_total - 1)
    else:
        def _tile(s, r):
            return s * tiles_per_shard + r

    kernel = functools.partial(
        _weighted_ce2_kernel,
        total_rows=R, tile_rows=TR,
        tiles_per_shard=tiles_per_shard, needs_mask=needs_mask)

    partial_sums = pl.pallas_call(
        kernel,
        out_shape=jax.ShapeDtypeStruct((shards, N, 2, 8, _LANE), jnp.float32),
        grid_spec=pltpu.PrefetchScalarGridSpec(
            num_scalar_prefetch=0,
            grid=(shards, N, tiles_per_shard),
            in_specs=[
                # both class slabs through one block: kernel sees (2, TR, 128)
                pl.BlockSpec((None, 2, TR, _LANE),
                             lambda s, n, r: (n, 0, _tile(s, r), 0)),
                pl.BlockSpec((None, TR, _LANE),
                             lambda s, n, r: (n, _tile(s, r), 0)),
            ],
            out_specs=pl.BlockSpec((None, None, 2, 8, _LANE),
                                   lambda s, n, r: (s, n, 0, 0, 0)),
        ),
        compiler_params=pltpu.CompilerParams(
            dimension_semantics=("parallel", "parallel", "arbitrary")),
    )(pred, target)

    num = jnp.sum(partial_sums[:, :, 0])
    den = jnp.sum(partial_sums[:, :, 1])
    return num / den    # NaN if every label has weight 0 — matches PyTorch behavior


def _reference_loss(pred, target):
    # pure-JAX reference of weighted CrossEntropyLoss([0.01, 1], reduction='mean')
    pred = jnp.asarray(pred, jnp.float32)
    if pred.ndim >= 2 and pred.shape[1] == 1:
        pred = jnp.squeeze(pred, axis=1)
    w = jnp.array([_W_CLASS0, _W_CLASS1], jnp.float32)
    logp = jax.nn.log_softmax(pred, axis=1)                               # (N,C,H,W)
    t = jnp.asarray(target, jnp.int32)
    logp_y = jnp.take_along_axis(logp, t[:, None, :, :], axis=1)[:, 0]    # (N,H,W)
    w_y = w[t]
    return jnp.sum(-w_y * logp_y) / jnp.sum(w_y)


if __name__ == "__main__":
    key = jax.random.PRNGKey(0)
    k1, k2, k3, k4 = jax.random.split(key, 4)

    # Small shape consistent with the module: (N, 2, H, W) logits + (N, H, W) labels.
    N, C, H, W = 2, 2, 16, 16
    pred = jax.random.normal(k1, (N, C, H, W), dtype=jnp.float32)
    target = jax.random.randint(k2, (N, H, W), 0, 2, dtype=jnp.int32)
    loss = tversky_loss(pred, target)
    jax.block_until_ready(loss)
    ref = _reference_loss(pred, target)
    assert jnp.allclose(loss, ref, rtol=1e-5, atol=1e-6), (loss, ref)

    # Larger bf16 check: exercises native-dtype streaming, the 2-way shard split,
    # the clamped overflow tile and the in-kernel tail mask (R = 4608 rows, TR = 2048).
    N2, H2, W2 = 1, 768, 768
    pred2 = jax.random.normal(k3, (N2, C, H2, W2), dtype=jnp.bfloat16)
    target2 = jax.random.randint(k4, (N2, H2, W2), 0, 2, dtype=jnp.int32)
    loss2 = tversky_loss(pred2, target2)
    jax.block_until_ready(loss2)
    ref2 = _reference_loss(pred2, target2)
    assert jnp.allclose(loss2, ref2, rtol=1e-3, atol=1e-3), (loss2, ref2)

    print("KERNEL_OK")
</pallas_src>

<mosaic_0001>
module attributes {stable_mosaic.version = 11 : i64} {
  func.func @_weighted_ce2_kernel(%arg0: i32, %arg1: i32, %arg2: i32, %arg3: memref<1x2x2x128xf32, #tpu.memory_space<vmem>>, %arg4: memref<1x2x128xi32, #tpu.memory_space<vmem>>, %arg5: memref<1x1x2x8x128xf32, #tpu.memory_space<vmem>>) attributes {dimension_semantics = [#tpu.dimension_semantics<parallel>, #tpu.dimension_semantics<parallel>, #tpu.dimension_semantics<arbitrary>], iteration_bounds = array<i64: 1, 2, 1>, scalar_prefetch = 0 : i64, scratch_operands = 0 : i64, tpu.core_type = #tpu.core_type<tc>, window_params = [{transform_indices = @transform_0, window_bounds = array<i64: 1, 2, 2, 128>}, {transform_indices = @transform_1, window_bounds = array<i64: 1, 2, 128>}, {transform_indices = @transform_2, window_bounds = array<i64: 1, 1, 2, 8, 128>}]} {
    %c0_i32 = arith.constant 0 : i32
    %0 = arith.cmpi eq, %arg2, %c0_i32 : i32
    %1 = arith.extui %0 : i1 to i32
    %c0_i32_0 = arith.constant 0 : i32
    %2 = arith.cmpi ne, %1, %c0_i32_0 : i32
    scf.if %2 {
      %cst_38 = arith.constant 0.000000e+00 : f32
      %49 = vector.broadcast %cst_38 : f32 to vector<2x8x128xf32>
      %c0_39 = arith.constant 0 : index
      %c0_40 = arith.constant 0 : index
      %c0_41 = arith.constant 0 : index
      %c0_42 = arith.constant 0 : index
      %c0_43 = arith.constant 0 : index
      %50 = vector.load %arg5[%c0_39, %c0_40, %c0_41, %c0_42, %c0_43] : memref<1x1x2x8x128xf32, #tpu.memory_space<vmem>>, vector<1x1x2x8x128xf32>
      %51 = vector.shape_cast %50 : vector<1x1x2x8x128xf32> to vector<2x8x128xf32>
      %52 = vector.shape_cast %49 : vector<2x8x128xf32> to vector<1x1x2x8x128xf32>
      tpu.vector_store %arg5[%c0_39, %c0_40, %c0_41, %c0_42, %c0_43], %52 {strides = array<i32>} : memref<1x1x2x8x128xf32, #tpu.memory_space<vmem>>, vector<1x1x2x8x128xf32>,
    } else {
    }
    %c0 = arith.constant 0 : index
    %c0_1 = arith.constant 0 : index
    %c0_2 = arith.constant 0 : index
    %c0_3 = arith.constant 0 : index
    %3 = vector.load %arg3[%c0, %c0_1, %c0_2, %c0_3] : memref<1x2x2x128xf32, #tpu.memory_space<vmem>>, vector<1x1x2x128xf32>
    %4 = vector.shape_cast %3 : vector<1x1x2x128xf32> to vector<2x128xf32>
    %c0_4 = arith.constant 0 : index
    %c1 = arith.constant 1 : index
    %c0_5 = arith.constant 0 : index
    %c0_6 = arith.constant 0 : index
    %5 = vector.load %arg3[%c0_4, %c1, %c0_5, %c0_6] : memref<1x2x2x128xf32, #tpu.memory_space<vmem>>, vector<1x1x2x128xf32>
    %6 = vector.shape_cast %5 : vector<1x1x2x128xf32> to vector<2x128xf32>
    %c0_7 = arith.constant 0 : index
    %c0_8 = arith.constant 0 : index
    %c0_9 = arith.constant 0 : index
    %7 = vector.load %arg4[%c0_7, %c0_8, %c0_9] : memref<1x2x128xi32, #tpu.memory_space<vmem>>, vector<1x2x128xi32>
    %8 = vector.shape_cast %7 : vector<1x2x128xi32> to vector<2x128xi32>
    %9 = arith.subf %4, %6 : vector<2x128xf32>
    %10 = math.absf %9 : vector<2x128xf32>
    %11 = arith.maximumf %4, %6 : vector<2x128xf32>
    %cst = arith.constant 0.000000e+00 : f32
    %12 = vector.broadcast %cst : f32 to vector<2x128xf32>
    %13 = arith.subf %12, %10 : vector<2x128xf32>
    %14 = math.exp %13 : vector<2x128xf32>
    %cst_10 = arith.constant 1.000000e+00 : f32
    %15 = vector.broadcast %cst_10 : f32 to vector<2x128xf32>
    %16 = arith.addf %15, %14 : vector<2x128xf32>
    %17 = math.log %16 : vector<2x128xf32>
    %18 = arith.addf %11, %17 : vector<2x128xf32>
    %c1_i32 = arith.constant 1 : i32
    %19 = vector.broadcast %c1_i32 : i32 to vector<2x128xi32>
    %20 = arith.cmpi eq, %8, %19 : vector<2x128xi32>
    %21 = arith.select %20, %6, %4 : vector<2x128xi1>, vector<2x128xf32>
    %c1_i32_11 = arith.constant 1 : i32
    %22 = vector.broadcast %c1_i32_11 : i32 to vector<2x128xi32>
    %23 = arith.cmpi eq, %8, %22 : vector<2x128xi32>
    %c0_i32_12 = arith.constant 0 : i32
    %24 = vector.broadcast %c0_i32_12 : i32 to vector<2x128xi32>
    %25 = arith.cmpi eq, %8, %24 : vector<2x128xi32>
    %cst_13 = arith.constant 0.00999999977 : f32
    %cst_14 = arith.constant 0.000000e+00 : f32
    %26 = vector.broadcast %cst_13 : f32 to vector<2x128xf32>
    %27 = vector.broadcast %cst_14 : f32 to vector<2x128xf32>
    %28 = arith.select %25, %26, %27 : vector<2x128xi1>, vector<2x128xf32>
    %cst_15 = arith.constant 1.000000e+00 : f32
    %29 = vector.broadcast %cst_15 : f32 to vector<2x128xf32>
    %30 = arith.select %23, %29, %28 : vector<2x128xi1>, vector<2x128xf32>
    %31 = arith.subf %18, %21 : vector<2x128xf32>
    %32 = arith.mulf %30, %31 : vector<2x128xf32>
    %c0_16 = arith.constant 0 : index
    %c0_17 = arith.constant 0 : index
    %c0_18 = arith.constant 0 : index
    %c0_19 = arith.constant 0 : index
    %c0_20 = arith.constant 0 : index
    %33 = vector.load %arg5[%c0_16, %c0_17, %c0_18, %c0_19, %c0_20] : memref<1x1x2x8x128xf32, #tpu.memory_space<vmem>>, vector<1x1x1x1x128xf32>
    %34 = vector.shape_cast %33 : vector<1x1x1x1x128xf32> to vector<1x128xf32>
    %cst_21 = arith.constant dense<0.000000e+00> : vector<128xf32>
    %35 = vector.multi_reduction <add>, %32, %cst_21 [0] : vector<2x128xf32> to vector<128xf32>
    %36 = vector.shape_cast %35 : vector<128xf32> to vector<1x128xf32>
    %37 = arith.addf %34, %36 : vector<1x128xf32>
    %c0_22 = arith.constant 0 : index
    %c0_23 = arith.constant 0 : index
    %c0_24 = arith.constant 0 : index
    %c0_25 = arith.constant 0 : index
    %c0_26 = arith.constant 0 : index
    %38 = vector.load %arg5[%c0_22, %c0_23, %c0_24, %c0_25, %c0_26] : memref<1x1x2x8x128xf32, #tpu.memory_space<vmem>>, vector<1x1x1x1x128xf32>
    %39 = vector.shape_cast %38 : vector<1x1x1x1x128xf32> to vector<1x128xf32>
    %40 = vector.shape_cast %37 : vector<1x128xf32> to vector<1x1x1x1x128xf32>
    tpu.vector_store %arg5[%c0_22, %c0_23, %c0_24, %c0_25, %c0_26], %40 {strides = array<i32>} : memref<1x1x2x8x128xf32, #tpu.memory_space<vmem>>, vector<1x1x1x1x128xf32>,
    %c0_27 = arith.constant 0 : index
    %c0_28 = arith.constant 0 : index
    %c1_29 = arith.constant 1 : index
    %c0_30 = arith.constant 0 : index
    %c0_31 = arith.constant 0 : index
    %41 = vector.load %arg5[%c0_27, %c0_28, %c1_29, %c0_30, %c0_31] : memref<1x1x2x8x128xf32, #tpu.memory_space<vmem>>, vector<1x1x1x1x128xf32>
    %42 = vector.shape_cast %41 : vector<1x1x1x1x128xf32> to vector<1x128xf32>
    %cst_32 = arith.constant dense<0.000000e+00> : vector<128xf32>
    %43 = vector.multi_reduction <add>, %30, %cst_32 [0] : vector<2x128xf32> to vector<128xf32>
    %44 = vector.shape_cast %43 : vector<128xf32> to vector<1x128xf32>
    %45 = arith.addf %42, %44 : vector<1x128xf32>
    %c0_33 = arith.constant 0 : index
    %c0_34 = arith.constant 0 : index
    %c1_35 = arith.constant 1 : index
    %c0_36 = arith.constant 0 : index
    %c0_37 = arith.constant 0 : index
    %46 = vector.load %arg5[%c0_33, %c0_34, %c1_35, %c0_36, %c0_37] : memref<1x1x2x8x128xf32, #tpu.memory_space<vmem>>, vector<1x1x1x1x128xf32>
    %47 = vector.shape_cast %46 : vector<1x1x1x1x128xf32> to vector<1x128xf32>
    %48 = vector.shape_cast %45 : vector<1x128xf32> to vector<1x1x1x1x128xf32>
    tpu.vector_store %arg5[%c0_33, %c0_34, %c1_35, %c0_36, %c0_37], %48 {strides = array<i32>} : memref<1x1x2x8x128xf32, #tpu.memory_space<vmem>>, vector<1x1x1x1x128xf32>,
    return
  }
  func.func @transform_0(%arg0: i32, %arg1: i32, %arg2: i32) -> (i32, i32, i32, i32) {
    %c1_i32 = arith.constant 1 : i32
    %0 = arith.muli %arg0, %c1_i32 : i32
    %1 = arith.addi %0, %arg2 : i32
    %c0_i32 = arith.constant 0 : i32
    %c0_i32_0 = arith.constant 0 : i32
    %c0_i32_1 = arith.constant 0 : i32
    return %arg1, %c0_i32, %1, %c0_i32_0 : i32, i32, i32, i32
  }
  func.func @transform_1(%arg0: i32, %arg1: i32, %arg2: i32) -> (i32, i32, i32) {
    %c1_i32 = arith.constant 1 : i32
    %0 = arith.muli %arg0, %c1_i32 : i32
    %1 = arith.addi %0, %arg2 : i32
    %c0_i32 = arith.constant 0 : i32
    %c0_i32_0 = arith.constant 0 : i32
    return %arg1, %1, %c0_i32 : i32, i32, i32
  }
  func.func @transform_2(%arg0: i32, %arg1: i32, %arg2: i32) -> (i32, i32, i32, i32, i32) {
    %c0_i32 = arith.constant 0 : i32
    %c0_i32_0 = arith.constant 0 : i32
    %c0_i32_1 = arith.constant 0 : i32
    %c0_i32_2 = arith.constant 0 : i32
    return %arg0, %arg1, %c0_i32, %c0_i32_0, %c0_i32_1 : i32, i32, i32, i32, i32
  }
}

</mosaic_0001>

<llo_original>
// kernel: tpu_custom_call.1
$region0: #{tpu_custom_call.1}
  #allocation0 [shape = 'u32[]', space=smem, size = 0x4, offset = 0x4, fixed_abs, tag = 'smem constant byte address 0x4 - core index']
  #allocation1 [shape = 'u32[72,128]{1,0:T(1,128)}', space=vmem, size = 0x9000, scoped, tag = 'internal scratch']
  %s0 = inlined_call_operand.hbm [shape: f32[2,2,2,128], index: 0, kind: input, shape index: {}]
  %s1 = inlined_call_operand.hbm [shape: s32[2,2,128], index: 1, kind: input, shape index: {}]
  %s2 = inlined_call_operand.hbm [shape: f32[1,2,2,8,128], index: 2, kind: output, shape index: {}]
  %s3 = sld [smem:[#allocation0]]
  $region53: #{tpu_custom_call.1} parent=0
    _
  %s5 = ssub.s32 1, %s3
  %s6 = scalar_select 0, %s5, %s3
  $region1: #{tpu_custom_call.1} parent=0
    #allocation2 [shape = 'u8[4096]{0}', space=vmem, size = 0x1000, scoped, tag = 'input window, operand 0']
    #allocation3 [shape = 's32[2]{0}', space=sflag, size = 0x8, scoped, tag = 'scoped memory for tpu_custom_call.1']
    #allocation4 [shape = 's32[2]{0}', space=sflag, size = 0x8, scoped, tag = 'scoped memory for tpu_custom_call.1']
    #allocation5 [shape = 'u8[2048]{0}', space=vmem, size = 0x800, scoped, tag = 'input window, operand 1']
    #allocation6 [shape = 's32[2]{0}', space=sflag, size = 0x8, scoped, tag = 'scoped memory for tpu_custom_call.1']
    #allocation7 [shape = 'u8[16384]{0}', space=vmem, size = 0x4000, scoped, tag = 'output window, operand 0']
    %7 = vsyncpa [#allocation3], 0
    %s8 = scalar_lea.sflag [#allocation3], 1
    %9 = vsyncpa %s8, 0
    %10 = vsyncpa [#allocation6], 0
    %s11 = scalar_lea.sflag [#allocation6], 1
    %12 = vsyncpa %s11, 0
    %13 = vsyncpa [#allocation4], 0
    %s14 = scalar_lea.sflag [#allocation4], 1
    %15 = vsyncpa %s14, 0
    loop: start=0, step=1, limit=4
    $region2: #{tpu_custom_call.1} parent=1 // loop_pre_header
      _
    $region3: #{tpu_custom_call.1} parent=1 // loop_header
      %s17 = sphi 0, %s21
      %p18 = scmp.ge.s32.totalorder %s17, 4
      %s24 = sphi 0, %s43
      %s25 = sphi 0, %s39
      %s26 = sphi 0, %s35
      %s27 = sphi 0, %s24
      %s28 = sphi 0, %s25
      %s29 = sphi 0, %s26
      %s30 = sphi 0, %s27
      %s31 = sphi 0, %s28
      %s32 = sphi 0, %s29
      %s50 = sphi 0, %s52
      %s53 = sphi 0, %s50
      %s54 = sphi 0, %s53
      %s70 = sphi 0, %s54
      %s80 = sphi 0, %s82
      %s83 = sphi 0, %s80
      %s84 = sphi 0, %s83
      %s100 = sphi 0, %s84
      %s108 = sphi 0, %s110
      %s111 = sphi 0, %s108
      %s112 = sphi 0, %s111
      %s128 = sphi 0, %s112
    $region4: #{tpu_custom_call.1} parent=1 // loop_header_branch
      %20 = sbr.rel (%p18) target = $region8
    $region5: #{tpu_custom_call.1} parent=1 // loop_body
      %s22 = ssub.s32 %s17, 1
      %s23 = ssub.s32 %s17, 2
      %s33 = sadd.s32 1, %s26
      %p34 = scmp.ge.s32.totalorder %s33, 1
      %s35 = scalar_select %p34, 0, %s33
      %s36 = sadd.s32 1, %s25
      %s37 = scalar_select %p34, %s36, %s25
      %p38 = scmp.ge.s32.totalorder %s37, 2
      %s39 = scalar_select %p38, 0, %s37
      %s40 = sadd.s32 1, %s24
      %s41 = scalar_select %p38, %s40, %s24
      %p42 = scmp.ge.s32.totalorder %s41, 1
      %s43 = scalar_select %p42, 0, %s41
      %s44 = sadd.s32 %s24, %s26
      %s45 = sadd.s32 %s43, %s35
      %s46 = ssub.s32 %s25, %s39
      %s47 = ssub.s32 %s44, %s45
      %s48 = sor.u32 %s46, %s47
      %p49 = scmp.eq.s32.totalorder %s48, 0
      %s51 = sadd.s32 %s50, 1
      %s52 = scalar_select %p49, %s50, %s51
      %p55 = pneg %p49
      %p56 = scmp.eq.s32.totalorder %s17, 1
      %p57 = por %p55, %p56
      %p58 = scmp.ne.s32.totalorder %s50, %s53
      %p59 = scmp.eq.s32.totalorder %s17, 0
      %p60 = por %p58, %p59
      %p61 = scmp.ne.s32.totalorder %s50, %s53
      %p62 = scmp.eq.s32.totalorder %s22, 1
      %p63 = por %p61, %p62
      %p64 = scmp.ne.s32.totalorder %s53, %s54
      %p65 = scmp.eq.s32.totalorder %s22, 0
      %p66 = por %p64, %p65
      %p67 = scmp.ne.s32.totalorder %s53, %s54
      %p68 = scmp.eq.s32.totalorder %s23, 1
      %p69 = por %p67, %p68
      %p71 = scmp.ne.s32.totalorder %s54, %s70
      %p72 = scmp.eq.s32.totalorder %s23, 0
      %p73 = por %p71, %p72
      %s74 = sadd.s32 %s24, %s26
      %s75 = sadd.s32 %s43, %s35
      %s76 = ssub.s32 %s25, %s39
      %s77 = ssub.s32 %s74, %s75
      %s78 = sor.u32 %s76, %s77
      %p79 = scmp.eq.s32.totalorder %s78, 0
      %s81 = sadd.s32 %s80, 1
      %s82 = scalar_select %p79, %s80, %s81
      %p85 = pneg %p79
      %p86 = scmp.eq.s32.totalorder %s17, 1
      %p87 = por %p85, %p86
      %p88 = scmp.ne.s32.totalorder %s80, %s83
      %p89 = scmp.eq.s32.totalorder %s17, 0
      %p90 = por %p88, %p89
      %p91 = scmp.ne.s32.totalorder %s80, %s83
      %p92 = scmp.eq.s32.totalorder %s22, 1
      %p93 = por %p91, %p92
      %p94 = scmp.ne.s32.totalorder %s83, %s84
      %p95 = scmp.eq.s32.totalorder %s22, 0
      %p96 = por %p94, %p95
      %p97 = scmp.ne.s32.totalorder %s83, %s84
      %p98 = scmp.eq.s32.totalorder %s23, 1
      %p99 = por %p97, %p98
      %p101 = scmp.ne.s32.totalorder %s84, %s100
      %p102 = scmp.eq.s32.totalorder %s23, 0
      %p103 = por %p101, %p102
      %s104 = ssub.s32 %s24, %s43
      %s105 = ssub.s32 %s25, %s39
      %s106 = sor.u32 %s104, %s105
      %p107 = scmp.eq.s32.totalorder %s106, 0
      %s109 = sadd.s32 %s108, 1
      %s110 = scalar_select %p107, %s108, %s109
      %p113 = pneg %p107
      %p114 = scmp.eq.s32.totalorder %s17, 1
      %p115 = por %p113, %p114
      %p116 = scmp.ne.s32.totalorder %s108, %s111
      %p117 = scmp.eq.s32.totalorder %s17, 0
      %p118 = por %p116, %p117
      %p119 = scmp.ne.s32.totalorder %s108, %s111
      %p120 = scmp.eq.s32.totalorder %s22, 1
      %p121 = por %p119, %p120
      %p122 = scmp.ne.s32.totalorder %s111, %s112
      %p123 = scmp.eq.s32.totalorder %s22, 0
      %p124 = por %p122, %p123
      %p125 = scmp.ne.s32.totalorder %s111, %s112
      %p126 = scmp.eq.s32.totalorder %s23, 1
      %p127 = por %p125, %p126
      %p129 = scmp.ne.s32.totalorder %s112, %s128
      %p130 = scmp.eq.s32.totalorder %s23, 0
      %p131 = por %p129, %p130
      %p132 = scmp.le.s32.totalorder 1, %s17
      %p133 = scmp.lt.s32.totalorder %s17, 3
      %p134 = pnand %p132, %p133
      %p135 = pneg %p134
      // Predicated region
      $region9: #{tpu_custom_call.1} parent=5 // pred_check
        _
      $region10: #{tpu_custom_call.1} parent=5 // pred_check_branch
        %137 = sbr.rel (%p134) target = $region12
      $region11: #{tpu_custom_call.1} parent=5 // pred_region
        %s138 = ssub.s32 %s17, 1
      $region12: #{tpu_custom_call.1} parent=5 // pred_fallthru
        _
      %p139 = scmp.lt.s32.totalorder %s17, 2
      // Predicated region
      $region13: #{tpu_custom_call.1} parent=5 // pred_check
        %p140 = pneg %p139
      $region14: #{tpu_custom_call.1} parent=5 // pred_check_branch
        %142 = sbr.rel (%p140) target = $region16
      $region15: #{tpu_custom_call.1} parent=5 // pred_region
        // Predicated region
        $region17: #{tpu_custom_call.1} parent=15 // pred_check
          %p143 = pneg %p60
        $region18: #{tpu_custom_call.1} parent=15 // pred_check_branch
          %145 = sbr.rel (%p143) target = $region20
        $region19: #{tpu_custom_call.1} parent=15 // pred_region
          %s146 = sand.u32 %s50, 1
          %s147 = scalar_lea.sflag [#allocation3], %s146
          %s148 = sand.u32 %s50, 1
          %s149 = smul.addr %s148, 4
          %s150 = scalar_lea.vmem [#allocation2], %s149
          %s151 = sadd.s32 %s24, %s26
          %153 = vsyncadd %s147, 0
          %s154 = smul.addr %s25, 2
          %s155 = sadd.s32 %s151, %s154
          %s156 = smul.addr %s155, 2
          %s157 = scalar_lea.hbm %s0, %s156
          %s158 = sshll.u32 %s157, 4
          %s159 = int_to_ptr.hbm [resolvable:$true] %s158
          %s160 = sshll.u32 %s150, 4
          %s161 = int_to_ptr.vmem [resolvable:$true] %s160
          %166 = dma.hbm_to_vmem [thread:$0]  %s159, 64, %s161, %s147, 32, 32, 2
        $region20: #{tpu_custom_call.1} parent=15 // pred_fallthru
          _
        // Predicated region
        $region21: #{tpu_custom_call.1} parent=15 // pred_check
          %p167 = pneg %p90
        $region22: #{tpu_custom_call.1} parent=15 // pred_check_branch
          %169 = sbr.rel (%p167) target = $region24
        $region23: #{tpu_custom_call.1} parent=15 // pred_region
          %s170 = sand.u32 %s80, 1
          %s171 = scalar_lea.sflag [#allocation6], %s170
          %s172 = sand.u32 %s80, 1
          %s173 = smul.addr %s172, 2
          %s174 = scalar_lea.vmem [#allocation5], %s173
          %s175 = sadd.s32 %s24, %s26
          %177 = vsyncadd %s171, 0
          %s178 = sadd.s32 %s175, %s25
          %s179 = smul.addr %s178, 2
          %s180 = scalar_lea.hbm %s1, %s179
          %s182 = sshll.u32 %s180, 4
          %s183 = int_to_ptr.hbm [resolvable:$true] %s182
          %s184 = sshll.u32 %s174, 4
          %s185 = int_to_ptr.vmem [resolvable:$true] %s184
          %187 = dma.hbm_to_vmem [thread:$0]  %s183, 32, %s185, %s171
        $region24: #{tpu_custom_call.1} parent=15 // pred_fallthru
          _
      $region16: #{tpu_custom_call.1} parent=5 // pred_fallthru
        _
      %p188 = scmp.le.s32.totalorder 1, %s17
      %p189 = scmp.lt.s32.totalorder %s17, 3
      %p190 = pnand %p188, %p189
      %p191 = pneg %p190
      // Predicated region
      $region25: #{tpu_custom_call.1} parent=5 // pred_check
        _
      $region26: #{tpu_custom_call.1} parent=5 // pred_check_branch
        %193 = sbr.rel (%p190) target = $region28
      $region27: #{tpu_custom_call.1} parent=5 // pred_region
        %s194 = ssub.s32 %s17, 1
        %s195 = sand.u32 %s53, 1
        %s196 = scalar_lea.sflag [#allocation3], %s195
        %s197 = sand.u32 %s53, 1
        %s198 = smul.addr %s197, 4
        %s199 = scalar_lea.vmem [#allocation2], %s198
        // Predicated region
        $region29: #{tpu_custom_call.1} parent=27 // pred_check
          %p200 = pneg %p66
        $region30: #{tpu_custom_call.1} parent=27 // pred_check_branch
          %202 = sbr.rel (%p200) target = $region32
        $region31: #{tpu_custom_call.1} parent=27 // pred_region
          %204 = dma.done %s196, 64
        $region32: #{tpu_custom_call.1} parent=27 // pred_fallthru
          _
        %s205 = sand.u32 %s83, 1
        %s206 = scalar_lea.sflag [#allocation6], %s205
        %s207 = sand.u32 %s83, 1
        %s208 = smul.addr %s207, 2
        %s209 = scalar_lea.vmem [#allocation5], %s208
        // Predicated region
        $region33: #{tpu_custom_call.1} parent=27 // pred_check
          %p210 = pneg %p96
        $region34: #{tpu_custom_call.1} parent=27 // pred_check_branch
          %212 = sbr.rel (%p210) target = $region36
        $region35: #{tpu_custom_call.1} parent=27 // pred_region
          %214 = dma.done %s206, 32
        $region36: #{tpu_custom_call.1} parent=27 // pred_fallthru
          _
        %s215 = sand.u32 %s53, 1
        %s216 = scalar_lea.sflag [#allocation3], %s215
        %s217 = sand.u32 %s53, 1
        %s218 = smul.addr %s217, 4
        %s219 = scalar_lea.vmem [#allocation2], %s218
        %p220 = pneg %p66
        %p221 = pneg %p63
        %s222 = sand.u32 %s83, 1
        %s223 = scalar_lea.sflag [#allocation6], %s222
        %s224 = sand.u32 %s83, 1
        %s225 = smul.addr %s224, 2
        %s226 = scalar_lea.vmem [#allocation5], %s225
        %p227 = pneg %p96
        %p228 = pneg %p93
        %p229 = pneg %p124
        %p230 = pneg %p121
        %s231 = sand.u32 %s111, 1
        %s232 = scalar_lea.sflag [#allocation4], %s231
        %s233 = sand.u32 %s111, 1
        %s234 = smul.addr %s233, 16
        %s235 = scalar_lea.vmem [#allocation7], %s234
        %s236 = sadd.s32 %s27, %s29
        %s237 = sadd.s32 %s27, %s29
        %p238 = scmp.eq.s32.totalorder %s29, 0
        // Predicated region
        $region37: #{tpu_custom_call.1} parent=27 // pred_check
          %p239 = pneg %p238
        $region38: #{tpu_custom_call.1} parent=27 // pred_check_branch
          %241 = sbr.rel (%p239) target = $region40
        $region39: #{tpu_custom_call.1} parent=27 // pred_region
          %242 = vst [vmem:[%s235] sm:$0xff] 0.0
          %243 = vst [vmem:[%s235 + $0x8] sm:$0xff] 0.0
        $region40: #{tpu_custom_call.1} parent=27 // pred_fallthru
          _
        %v244 = vld [vmem:[%s199] sm:$0x3]
        %s245 = scalar_lea.vmem %s199, 2 [#allocation2]
        %v246 = vld [vmem:[%s245] sm:$0x3]
        %v247 = vld [vmem:[%s209] sm:$0x3]
        %v248 = vsub.f32 %v244, %v246
        %v249 = vand.u32 2147483647, %v248
        %v250 = vmax.f32 %v244, %v246
        %v251 = vsub.f32 0.0, %v249
        %v252 = vmul.f32 %v251, 1.442695
        %v253 = vpow.pop %v252
        %v254 = vadd.f32 %v253, 1.0
        %v255 = vlog2.pop %v254
        %v256 = vmul.f32 %v255, 0.6931472
        %v257 = vadd.f32 %v250, %v256
        %vm258 = vcmp.eq.s32.totalorder %v247, 1
        %v259 = vsel %vm258, %v246, %v244
        %vm260 = vcmp.eq.s32.totalorder %v247, 0
        %v261 = vsel %vm260, 0.01, 0.0
        %v262 = vsel %vm258, 1.0, %v261
        %v263 = vsub.f32 %v257, %v259
        %v264 = vmul.f32 %v262, %v263
        %v265 = vld [vmem:[%s235] sm:$0x1]
        %vm266 = vcmask 1041408
        %v267 = vsel %vm266, %v264, 0.0
        %v268 = vrot.slane %v267, 4
        %v269 = vadd.f32 %v267, %v268
        %v270 = vrot.slane %v269, 2
        %v271 = vadd.f32 %v269, %v270
        %v272 = vrot.slane %v271, 1
        %v273 = vadd.f32 %v271, %v272
        %v274 = vadd.f32 %v265, %v273
        %275 = vst [vmem:[%s235] sm:$0x1] %v274
        %s276 = scalar_lea.vmem %s235, 8 [#allocation7]
        %v277 = vld [vmem:[%s276] sm:$0x1]
        %v278 = vsel %vm266, %v262, 0.0
        %v279 = vrot.slane %v278, 4
        %v280 = vadd.f32 %v278, %v279
        %v281 = vrot.slane %v280, 2
        %v282 = vadd.f32 %v280, %v281
        %v283 = vrot.slane %v282, 1
        %v284 = vadd.f32 %v282, %v283
        %v285 = vadd.f32 %v277, %v284
        %286 = vst [vmem:[%s276] sm:$0x1] %v285
        %s287 = sand.u32 %s111, 1
        %s288 = scalar_lea.sflag [#allocation4], %s287
        %s289 = sand.u32 %s111, 1
        %s290 = smul.addr %s289, 16
        %s291 = scalar_lea.vmem [#allocation7], %s290
        // Predicated region
        $region41: #{tpu_custom_call.1} parent=27 // pred_check
          %p292 = pneg %p121
        $region42: #{tpu_custom_call.1} parent=27 // pred_check_branch
          %294 = sbr.rel (%p292) target = $region44
        $region43: #{tpu_custom_call.1} parent=27 // pred_region
          %296 = vsyncadd %s288, 0
          %s297 = smul.addr %s28, 2
          %s298 = smul.addr %s27, 4
          %s299 = sadd.s32 %s297, %s298
          %s300 = smul.addr %s299, 8
          %s301 = scalar_lea.hbm %s2, %s300
          %s302 = sshll.u32 %s291, 4
          %s303 = int_to_ptr.vmem [resolvable:$true] %s302
          %s304 = sshll.u32 %s301, 4
          %s305 = int_to_ptr.hbm [resolvable:$true] %s304
          %310 = dma.vmem_to_hbm [thread:$0]  %s303, 256, %s305, %s288, 128, 128, 8
        $region44: #{tpu_custom_call.1} parent=27 // pred_fallthru
          _
      $region28: #{tpu_custom_call.1} parent=5 // pred_fallthru
        _
      %p311 = scmp.le.s32.totalorder 2, %s17
      // Predicated region
      $region45: #{tpu_custom_call.1} parent=5 // pred_check
        %p312 = pneg %p311
      $region46: #{tpu_custom_call.1} parent=5 // pred_check_branch
        %314 = sbr.rel (%p312) target = $region48
      $region47: #{tpu_custom_call.1} parent=5 // pred_region
        %s315 = ssub.s32 %s17, 2
        // Predicated region
        $region49: #{tpu_custom_call.1} parent=47 // pred_check
          %p316 = pneg %p127
        $region50: #{tpu_custom_call.1} parent=47 // pred_check_branch
          %318 = sbr.rel (%p316) target = $region52
        $region51: #{tpu_custom_call.1} parent=47 // pred_region
          %s319 = sand.u32 %s112, 1
          %s320 = scalar_lea.sflag [#allocation4], %s319
          %s321 = sand.u32 %s112, 1
          %s322 = smul.addr %s321, 16
          %s323 = scalar_lea.vmem [#allocation7], %s322
          %325 = dma.done %s320, 256
        $region52: #{tpu_custom_call.1} parent=47 // pred_fallthru
          _
      $region48: #{tpu_custom_call.1} parent=5 // pred_fallthru
        _
    $region6: #{tpu_custom_call.1} parent=1 // loop_footer
      %s21 = sadd.s32 1, %s17
    $region7: #{tpu_custom_call.1} parent=1 // loop_footer_branch
      %16 = sbr.rel target = $region3
    $region8: #{tpu_custom_call.1} parent=1 // loop_exit
      _
    %326 = vsyncpa [#allocation3], 1
    %s327 = scalar_lea.sflag [#allocation3], 1
    %328 = vsyncpa %s327, 1
    %329 = vsyncpa [#allocation6], 1
    %s330 = scalar_lea.sflag [#allocation6], 1
    %331 = vsyncpa %s330, 1
    %332 = vsyncpa [#allocation4], 1
    %s333 = scalar_lea.sflag [#allocation4], 1
    %334 = vsyncpa %s333, 1

</llo_original>
